<compile_context>
chip_gen: v7x
topology: tpu7x:2x2x1
jax: 0.10.0
libtpu: 0.0.40
codegen_flags: <defaults>
</compile_context>

<pallas_src>
import jax
import jax.numpy as jnp
from jax.experimental import pallas as pl
from jax.experimental.pallas import tpu as pltpu


def _scale_rows_kernel(k2_ref, feat_ref, out_ref):
    """out[r, c] = k2[r, 0] * feat[r, c] for one (TR, THW) tile."""
    k = k2_ref[...]                                      # (TR, 1) f32, lane-broadcast
    if feat_ref.dtype == jnp.bfloat16:
        # bf16 VALU on v6e/v7x: halve live vreg bytes / VALU ops per tile.
        out_ref[...] = feat_ref[...] * k.astype(jnp.bfloat16)
    else:
        out_ref[...] = (feat_ref[...].astype(jnp.float32) * k).astype(out_ref.dtype)


def _pick_tile(dim, target, align):
    """Largest align-multiple tile <= target; full dim if it already fits.

    The returned tile is always a legal TPU block size (multiple of `align`
    or equal to the full dim); the grid uses cdiv so non-dividing dims just
    get a masked edge block.
    """
    if dim <= target:
        return dim
    return max((target // align) * align, align)


def _round_up(x, m):
    return ((x + m - 1) // m) * m


def _chip_tile_plan():
    """(row_tile_target, hw_tile_target, vmem_limit_bytes) per TPU generation."""
    kind = ""
    try:
        kind = jax.devices()[0].device_kind.lower()
    except Exception:
        pass
    if "v5" in kind:
        # ~820 GB/s: a (512,2048) f32 step is ~10 us -> already near roofline.
        return 512, 2048, None
    if "v6" in kind:
        # 128 MiB physical VMEM; 8 MiB in + 8 MiB out double-buffered = 32 MiB
        # is exactly the default scoped limit -> raise it explicitly.
        return 512, 4096, 64 * 2**20
    if "v7" in kind:
        # 64 MiB physical VMEM: leave headroom below the ceiling.
        return 512, 4096, 45 * 2**20
    # Unknown chip: conservative defaults that fit the 32 MiB scoped default.
    return 512, 2048, None


def sigmoid_inst_head_forward(soft_score, kernel_weight, encode_feat, conv_w, conv_b,
                              *, row_tile_target=None, hw_tile_target=None,
                              vmem_limit_bytes=None, min_pallas_bytes=2 * 2**20):
    B, _, Hk, Wk = soft_score.shape
    _, Cin, _, _ = kernel_weight.shape
    _, Cout, H, W = encode_feat.shape
    P = Hk * Wk
    HW = H * W
    R = B * Cout

    plan_tr, plan_thw, plan_vmem = _chip_tile_plan()
    row_tile_target = plan_tr if row_tile_target is None else row_tile_target
    hw_tile_target = plan_thw if hw_tile_target is None else hw_tile_target
    vmem_limit_bytes = plan_vmem if vmem_limit_bytes is None else vmem_limit_bytes

    # ---- per-instance 1x1-conv kernel (a few KB of operands, plain XLA) ----
    # NOTE: the normalization sums over the WHOLE soft_score tensor (batch and
    # space), exactly as `score.sum()` does in the PyTorch module.
    s = jax.nn.sigmoid(soft_score.reshape(B, P).astype(jnp.float32))
    s = s / jnp.sum(s)
    kw = kernel_weight.reshape(B, Cin, P).astype(jnp.float32)
    k = jnp.einsum("bcp,bp->bc", kw, s)                                   # (B, Cin)
    w2d = conv_w.reshape(Cout, Cin).astype(jnp.float32)
    k2 = k @ w2d.T + conv_b.reshape(1, Cout).astype(jnp.float32)          # (B, Cout)

    itemsize = jnp.dtype(encode_feat.dtype).itemsize

    # ---- small-input fallback: pallas_call would be pure launch overhead ----
    if R * HW * itemsize < min_pallas_bytes:
        out = encode_feat.astype(jnp.float32) * k2[:, :, None, None]
        return out.astype(encode_feat.dtype)

    # ---- memory-bound broadcast multiply: single Pallas kernel --------------
    k2_col = k2.reshape(R, 1)                            # f32 multiplier per row
    feat2d = encode_feat.reshape(R, HW)                  # keep source dtype

    tr = _pick_tile(R, row_tile_target, 8)               # sublane tile
    thw = _pick_tile(HW, hw_tile_target, 128)            # lane tile (unmasked vst)
    grid_r = pl.cdiv(R, tr)
    grid_hw = pl.cdiv(HW, thw)

    # Ensure >=2 "parallel" grid programs so both TensorCores on v7x get work.
    if grid_r * grid_hw == 1:
        if HW >= 256:
            thw = max(128, _round_up(pl.cdiv(HW, 2), 128))
            grid_hw = pl.cdiv(HW, thw)
        elif R >= 16:
            tr = max(8, _round_up(pl.cdiv(R, 2), 8))
            grid_r = pl.cdiv(R, tr)

    grid = (grid_r, grid_hw)                             # rows outer, HW inner:
    # k2's block index (i, 0) is constant across the inner loop -> DMA'd once
    # per row tile.

    cp_kwargs = dict(dimension_semantics=("parallel", "parallel"))
    if vmem_limit_bytes is not None:
        cp_kwargs["vmem_limit_bytes"] = int(vmem_limit_bytes)

    cost = pl.CostEstimate(
        flops=R * HW,
        transcendentals=0,
        bytes_accessed=2 * R * HW * itemsize + R * 4,
    )

    # TODO(synk): if encode_feat is dead after this op, input_output_aliases={1: 0}
    # would drop the second R*HW HBM allocation (same bandwidth, lower footprint).
    out2d = pl.pallas_call(
        _scale_rows_kernel,
        out_shape=jax.ShapeDtypeStruct((R, HW), encode_feat.dtype),
        grid=grid,
        in_specs=[
            pl.BlockSpec((tr, 1), lambda i, j: (i, 0)),
            pl.BlockSpec((tr, thw), lambda i, j: (i, j)),
        ],
        out_specs=pl.BlockSpec((tr, thw), lambda i, j: (i, j)),
        compiler_params=pltpu.CompilerParams(**cp_kwargs),
        cost_estimate=cost,
    )(k2_col, feat2d)

    return out2d.reshape(B, Cout, H, W)


def reference_forward(soft_score, kernel_weight, encode_feat, conv_w, conv_b):
    """Pure-JAX reference matching the PyTorch module semantics."""
    s = jax.nn.sigmoid(soft_score.astype(jnp.float32))
    s = s / jnp.sum(s)
    k = jnp.sum(kernel_weight.astype(jnp.float32) * s, axis=(2, 3))      # (B, Cin)
    w2d = conv_w.reshape(conv_w.shape[0], conv_w.shape[1]).astype(jnp.float32)
    k2 = k @ w2d.T + conv_b.astype(jnp.float32)                          # (B, Cout)
    out = encode_feat.astype(jnp.float32) * k2[:, :, None, None]
    return out.astype(encode_feat.dtype)


if __name__ == "__main__":
    # Small shapes consistent with the module (input_dim -> Cin, output_dim -> Cout).
    B, Cin, Cout = 2, 32, 16
    Hk, Wk = 16, 16        # spatial size of soft_score / kernel_weight
    H, W = 16, 16          # spatial size of encode_feat
    H2, W2 = 20, 20        # second feature map: H*W not a multiple of 128

    key = jax.random.PRNGKey(0)
    k1, k2_, k3, k4, k5, k6 = jax.random.split(key, 6)

    soft_score = jax.random.normal(k1, (B, 1, Hk, Wk), dtype=jnp.float32)
    kernel_weight = jax.random.normal(k2_, (B, Cin, Hk, Wk), dtype=jnp.float32)
    encode_feat = jax.random.normal(k3, (B, Cout, H, W), dtype=jnp.float32)
    encode_feat2 = jax.random.normal(k6, (B, Cout, H2, W2), dtype=jnp.float32)

    # Deterministic 1x1 conv params (nn.Conv2d(input_dim, output_dim, kernel_size=1)).
    conv_w = jax.random.normal(k4, (Cout, Cin, 1, 1), dtype=jnp.float32) * (1.0 / jnp.sqrt(Cin))
    conv_b = jax.random.normal(k5, (Cout,), dtype=jnp.float32) * 0.01

    ref = reference_forward(soft_score, kernel_weight, encode_feat, conv_w, conv_b)
    ref2 = reference_forward(soft_score, kernel_weight, encode_feat2, conv_w, conv_b)

    # 1) Force the Pallas path at the demo size (exercises the >=2-program split).
    out = sigmoid_inst_head_forward(soft_score, kernel_weight, encode_feat,
                                    conv_w, conv_b, min_pallas_bytes=0)
    out = jax.block_until_ready(out)
    assert out.shape == (B, Cout, H, W)
    assert out.dtype == encode_feat.dtype
    assert jnp.allclose(out, ref, rtol=1e-5, atol=1e-5), "pallas path mismatch"

    # 2) Force small tiles on a non-128-multiple HW to exercise cdiv + masked edge blocks.
    out_edge = sigmoid_inst_head_forward(soft_score, kernel_weight, encode_feat2,
                                         conv_w, conv_b, min_pallas_bytes=0,
                                         row_tile_target=8, hw_tile_target=128)
    out_edge = jax.block_until_ready(out_edge)
    assert out_edge.shape == (B, Cout, H2, W2)
    assert jnp.allclose(out_edge, ref2, rtol=1e-5, atol=1e-5), "edge-tiled path mismatch"

    # 3) Default settings: small-input fallback (pure jnp) must match too.
    out_fb = sigmoid_inst_head_forward(soft_score, kernel_weight, encode_feat,
                                       conv_w, conv_b)
    out_fb = jax.block_until_ready(out_fb)
    assert jnp.allclose(out_fb, ref, rtol=1e-5, atol=1e-5), "fallback path mismatch"

    print("KERNEL_OK")
</pallas_src>

<mosaic_0001>
module attributes {stable_mosaic.version = 11 : i64} {
  func.func @_scale_rows_kernel(%arg0: i32, %arg1: i32, %arg2: memref<32x1xf32, #tpu.memory_space<vmem>>, %arg3: memref<32x128xf32, #tpu.memory_space<vmem>>, %arg4: memref<32x128xf32, #tpu.memory_space<vmem>>) attributes {dimension_semantics = [#tpu.dimension_semantics<parallel>, #tpu.dimension_semantics<parallel>], iteration_bounds = array<i64: 1, 2>, scalar_prefetch = 0 : i64, scratch_operands = 0 : i64, tpu.core_type = #tpu.core_type<tc>, window_params = [{transform_indices = @transform_0, window_bounds = array<i64: 32, 1>}, {transform_indices = @transform_1, window_bounds = array<i64: 32, 128>}, {transform_indices = @transform_2, window_bounds = array<i64: 32, 128>}]} {
    %c0 = arith.constant 0 : index
    %c0_0 = arith.constant 0 : index
    %0 = vector.load %arg2[%c0, %c0_0] : memref<32x1xf32, #tpu.memory_space<vmem>>, vector<32x1xf32>
    %c0_1 = arith.constant 0 : index
    %c0_2 = arith.constant 0 : index
    %1 = vector.load %arg3[%c0_1, %c0_2] : memref<32x128xf32, #tpu.memory_space<vmem>>, vector<32x128xf32>
    %2 = vector.broadcast %0 : vector<32x1xf32> to vector<32x128xf32>
    %3 = arith.mulf %1, %2 : vector<32x128xf32>
    %c0_3 = arith.constant 0 : index
    %c0_4 = arith.constant 0 : index
    %4 = vector.load %arg4[%c0_3, %c0_4] : memref<32x128xf32, #tpu.memory_space<vmem>>, vector<32x128xf32>
    tpu.vector_store %arg4[%c0_3, %c0_4], %3 {strides = array<i32>} : memref<32x128xf32, #tpu.memory_space<vmem>>, vector<32x128xf32>,
    return
  }
  func.func @transform_0(%arg0: i32, %arg1: i32) -> (i32, i32) {
    %c0_i32 = arith.constant 0 : i32
    %c0_i32_0 = arith.constant 0 : i32
    return %arg0, %c0_i32 : i32, i32
  }
  func.func @transform_1(%arg0: i32, %arg1: i32) -> (i32, i32) {
    %c0_i32 = arith.constant 0 : i32
    return %arg0, %arg1 : i32, i32
  }
  func.func @transform_2(%arg0: i32, %arg1: i32) -> (i32, i32) {
    %c0_i32 = arith.constant 0 : i32
    return %arg0, %arg1 : i32, i32
  }
}

</mosaic_0001>

<llo_original>
// kernel: tpu_custom_call.1
$region0: #{tpu_custom_call.1}
  #allocation0 [shape = 'u32[]', space=smem, size = 0x4, offset = 0x4, fixed_abs, tag = 'smem constant byte address 0x4 - core index']
  #allocation1 [shape = 'u32[144,128]{1,0:T(1,128)}', space=vmem, size = 0x12000, scoped, tag = 'internal scratch']
  %s0 = inlined_call_operand.vmem [shape: f32[32,1], index: 0, kind: input, shape index: {}]
  %s1 = inlined_call_operand.hbm [shape: f32[32,256], index: 1, kind: input, shape index: {}]
  %s2 = inlined_call_operand.hbm [shape: f32[32,256], index: 2, kind: output, shape index: {}]
  %s3 = sld [smem:[#allocation0]]
  $region45: #{tpu_custom_call.1} parent=0
    _
  %s5 = ssub.s32 1, %s3
  %s6 = scalar_select 0, %s5, %s3
  $region1: #{tpu_custom_call.1} parent=0
    #allocation2 [shape = 'u8[32768]{0}', space=vmem, size = 0x8000, scoped, tag = 'input window, operand 1']
    #allocation3 [shape = 's32[2]{0}', space=sflag, size = 0x8, scoped, tag = 'scoped memory for tpu_custom_call.1']
    #allocation4 [shape = 's32[2]{0}', space=sflag, size = 0x8, scoped, tag = 'scoped memory for tpu_custom_call.1']
    #allocation5 [shape = 'u8[32768]{0}', space=vmem, size = 0x8000, scoped, tag = 'output window, operand 0']
    %7 = vsyncpa [#allocation3], 0
    %s8 = scalar_lea.sflag [#allocation3], 1
    %9 = vsyncpa %s8, 0
    %10 = vsyncpa [#allocation4], 0
    %s11 = scalar_lea.sflag [#allocation4], 1
    %12 = vsyncpa %s11, 0
    loop: start=0, step=1, limit=4
    $region2: #{tpu_custom_call.1} parent=1 // loop_pre_header
      _
    $region3: #{tpu_custom_call.1} parent=1 // loop_header
      %s14 = sphi 0, %s18
      %p15 = scmp.ge.s32.totalorder %s14, 4
      %s21 = sphi 0, %s33
      %s22 = sphi 0, %s29
      %s23 = sphi 0, %s21
      %s24 = sphi 0, %s22
      %s25 = sphi 0, %s23
      %s26 = sphi 0, %s24
      %s36 = sphi 0, %s38
      %s39 = sphi 0, %s36
      %s40 = sphi 0, %s39
      %s56 = sphi 0, %s40
      %s64 = sphi 0, %s66
      %s67 = sphi 0, %s64
      %s68 = sphi 0, %s67
      %s84 = sphi 0, %s68
      %s92 = sphi 0, %s94
      %s95 = sphi 0, %s92
      %s96 = sphi 0, %s95
      %s112 = sphi 0, %s96
    $region4: #{tpu_custom_call.1} parent=1 // loop_header_branch
      %17 = sbr.rel (%p15) target = $region8
    $region5: #{tpu_custom_call.1} parent=1 // loop_body
      %s19 = ssub.s32 %s14, 1
      %s20 = ssub.s32 %s14, 2
      %s27 = sadd.s32 1, %s22
      %p28 = scmp.ge.s32.totalorder %s27, 2
      %s29 = scalar_select %p28, 0, %s27
      %s30 = sadd.s32 1, %s21
      %s31 = scalar_select %p28, %s30, %s21
      %p32 = scmp.ge.s32.totalorder %s31, 1
      %s33 = scalar_select %p32, 0, %s31
      %s34 = ssub.s32 %s21, %s33
      %p35 = scmp.eq.s32.totalorder %s34, 0
      %s37 = sadd.s32 %s36, 1
      %s38 = scalar_select %p35, %s36, %s37
      %p41 = pneg %p35
      %p42 = scmp.eq.s32.totalorder %s14, 1
      %p43 = por %p41, %p42
      %p44 = scmp.ne.s32.totalorder %s36, %s39
      %p45 = scmp.eq.s32.totalorder %s14, 0
      %p46 = por %p44, %p45
      %p47 = scmp.ne.s32.totalorder %s36, %s39
      %p48 = scmp.eq.s32.totalorder %s19, 1
      %p49 = por %p47, %p48
      %p50 = scmp.ne.s32.totalorder %s39, %s40
      %p51 = scmp.eq.s32.totalorder %s19, 0
      %p52 = por %p50, %p51
      %p53 = scmp.ne.s32.totalorder %s39, %s40
      %p54 = scmp.eq.s32.totalorder %s20, 1
      %p55 = por %p53, %p54
      %p57 = scmp.ne.s32.totalorder %s40, %s56
      %p58 = scmp.eq.s32.totalorder %s20, 0
      %p59 = por %p57, %p58
      %s60 = ssub.s32 %s21, %s33
      %s61 = ssub.s32 %s22, %s29
      %s62 = sor.u32 %s60, %s61
      %p63 = scmp.eq.s32.totalorder %s62, 0
      %s65 = sadd.s32 %s64, 1
      %s66 = scalar_select %p63, %s64, %s65
      %p69 = pneg %p63
      %p70 = scmp.eq.s32.totalorder %s14, 1
      %p71 = por %p69, %p70
      %p72 = scmp.ne.s32.totalorder %s64, %s67
      %p73 = scmp.eq.s32.totalorder %s14, 0
      %p74 = por %p72, %p73
      %p75 = scmp.ne.s32.totalorder %s64, %s67
      %p76 = scmp.eq.s32.totalorder %s19, 1
      %p77 = por %p75, %p76
      %p78 = scmp.ne.s32.totalorder %s67, %s68
      %p79 = scmp.eq.s32.totalorder %s19, 0
      %p80 = por %p78, %p79
      %p81 = scmp.ne.s32.totalorder %s67, %s68
      %p82 = scmp.eq.s32.totalorder %s20, 1
      %p83 = por %p81, %p82
      %p85 = scmp.ne.s32.totalorder %s68, %s84
      %p86 = scmp.eq.s32.totalorder %s20, 0
      %p87 = por %p85, %p86
      %s88 = ssub.s32 %s21, %s33
      %s89 = ssub.s32 %s22, %s29
      %s90 = sor.u32 %s88, %s89
      %p91 = scmp.eq.s32.totalorder %s90, 0
      %s93 = sadd.s32 %s92, 1
      %s94 = scalar_select %p91, %s92, %s93
      %p97 = pneg %p91
      %p98 = scmp.eq.s32.totalorder %s14, 1
      %p99 = por %p97, %p98
      %p100 = scmp.ne.s32.totalorder %s92, %s95
      %p101 = scmp.eq.s32.totalorder %s14, 0
      %p102 = por %p100, %p101
      %p103 = scmp.ne.s32.totalorder %s92, %s95
      %p104 = scmp.eq.s32.totalorder %s19, 1
      %p105 = por %p103, %p104
      %p106 = scmp.ne.s32.totalorder %s95, %s96
      %p107 = scmp.eq.s32.totalorder %s19, 0
      %p108 = por %p106, %p107
      %p109 = scmp.ne.s32.totalorder %s95, %s96
      %p110 = scmp.eq.s32.totalorder %s20, 1
      %p111 = por %p109, %p110
      %p113 = scmp.ne.s32.totalorder %s96, %s112
      %p114 = scmp.eq.s32.totalorder %s20, 0
      %p115 = por %p113, %p114
      %p116 = scmp.le.s32.totalorder 1, %s14
      %p117 = scmp.lt.s32.totalorder %s14, 3
      %p118 = pnand %p116, %p117
      %p119 = pneg %p118
      // Predicated region
      $region9: #{tpu_custom_call.1} parent=5 // pred_check
        _
      $region10: #{tpu_custom_call.1} parent=5 // pred_check_branch
        %121 = sbr.rel (%p118) target = $region12
      $region11: #{tpu_custom_call.1} parent=5 // pred_region
        %s122 = ssub.s32 %s14, 1
        // Predicated region
        $region13: #{tpu_custom_call.1} parent=11 // pred_check
          %p123 = pneg %p52
        $region14: #{tpu_custom_call.1} parent=11 // pred_check_branch
          %125 = sbr.rel (%p123) target = $region16
        $region15: #{tpu_custom_call.1} parent=11 // pred_region
          %s126 = smul.u32 4, %s23
          %p127 = scmp.lt.s32.totalorder %s126, 3
          %s128 = scalar_select %p127, %s126, 3
          %s129 = smul.addr %s128, 8
          %s130 = scalar_lea.vmem %s0, %s129
          %s131 = smul.u32 4, %s23
        $region16: #{tpu_custom_call.1} parent=11 // pred_fallthru
          _
      $region12: #{tpu_custom_call.1} parent=5 // pred_fallthru
        _
      %p132 = scmp.lt.s32.totalorder %s14, 2
      // Predicated region
      $region17: #{tpu_custom_call.1} parent=5 // pred_check
        %p133 = pneg %p132
      $region18: #{tpu_custom_call.1} parent=5 // pred_check_branch
        %135 = sbr.rel (%p133) target = $region20
      $region19: #{tpu_custom_call.1} parent=5 // pred_region
        // Predicated region
        $region21: #{tpu_custom_call.1} parent=19 // pred_check
          %p136 = pneg %p74
        $region22: #{tpu_custom_call.1} parent=19 // pred_check_branch
          %138 = sbr.rel (%p136) target = $region24
        $region23: #{tpu_custom_call.1} parent=19 // pred_region
          %s139 = sand.u32 %s64, 1
          %s140 = scalar_lea.sflag [#allocation3], %s139
          %s141 = sand.u32 %s64, 1
          %s142 = smul.addr %s141, 32
          %s143 = scalar_lea.vmem [#allocation2], %s142
          %s144 = smul.u32 4, %s21
          %s146 = ssub.s32 512, 512
          %147 = vsyncadd %s140, %s146
          %s148 = smul.addr %s144, 2
          %s149 = sadd.s32 %s22, %s148
          %s150 = smul.addr %s149, 128
          %s151 = scalar_lea.hbm %s1, %s150
          %s152 = sshll.u32 %s143, 4
          %s153 = int_to_ptr.vmem [resolvable:$true] %s152
          %158 = dma.hbm_to_vmem [thread:$0]  %s151, 512, %s153, %s140, 256, 128, 8
        $region24: #{tpu_custom_call.1} parent=19 // pred_fallthru
          _
      $region20: #{tpu_custom_call.1} parent=5 // pred_fallthru
        _
      %p159 = scmp.le.s32.totalorder 1, %s14
      %p160 = scmp.lt.s32.totalorder %s14, 3
      %p161 = pnand %p159, %p160
      %p162 = pneg %p161
      // Predicated region
      $region25: #{tpu_custom_call.1} parent=5 // pred_check
        _
      $region26: #{tpu_custom_call.1} parent=5 // pred_check_branch
        %164 = sbr.rel (%p161) target = $region28
      $region27: #{tpu_custom_call.1} parent=5 // pred_region
        %s165 = ssub.s32 %s14, 1
        %s166 = sand.u32 %s67, 1
        %s167 = scalar_lea.sflag [#allocation3], %s166
        %s168 = sand.u32 %s67, 1
        %s169 = smul.addr %s168, 32
        %s170 = scalar_lea.vmem [#allocation2], %s169
        // Predicated region
        $region29: #{tpu_custom_call.1} parent=27 // pred_check
          %p171 = pneg %p80
        $region30: #{tpu_custom_call.1} parent=27 // pred_check_branch
          %173 = sbr.rel (%p171) target = $region32
        $region31: #{tpu_custom_call.1} parent=27 // pred_region
          %174 = dma.done %s167, 512
        $region32: #{tpu_custom_call.1} parent=27 // pred_fallthru
          _
        %s175 = smul.u32 4, %s23
        %p176 = scmp.lt.s32.totalorder %s175, 3
        %s177 = scalar_select %p176, %s175, 3
        %s178 = smul.addr %s177, 8
        %s179 = scalar_lea.vmem %s0, %s178
        %p180 = pneg %p52
        %p181 = pneg %p49
        %s182 = sand.u32 %s67, 1
        %s183 = scalar_lea.sflag [#allocation3], %s182
        %s184 = sand.u32 %s67, 1
        %s185 = smul.addr %s184, 32
        %s186 = scalar_lea.vmem [#allocation2], %s185
        %p187 = pneg %p80
        %p188 = pneg %p77
        %p189 = pneg %p108
        %p190 = pneg %p105
        %s191 = sand.u32 %s95, 1
        %s192 = scalar_lea.sflag [#allocation4], %s191
        %s193 = sand.u32 %s95, 1
        %s194 = smul.addr %s193, 32
        %s195 = scalar_lea.vmem [#allocation5], %s194
        %s196 = smul.u32 4, %s23
        %p197 = scmp.lt.s32.totalorder %s196, 3
        %s198 = scalar_select %p197, %s196, 3
        %s199 = smul.addr %s198, 8
        %s200 = scalar_lea.vmem %s0, %s199
        %s201 = smul.u32 4, %s23
        %s202 = smul.u32 4, %s23
        %s203 = smul.u32 4, %s23
        %v204 = vld [vmem:[%s200] sm:$0xff]
        %v205 = vld [vmem:[%s200 + $0x8] sm:$0xff]
        %v206 = vld [vmem:[%s200 + $0x10] sm:$0xff]
        %v207 = vld [vmem:[%s200 + $0x18] sm:$0xff]
        %v208 = vld [vmem:[%s170] sm:$0xff]
        %v209 = vld [vmem:[%s170 + $0x8] sm:$0xff]
        %v210 = vld [vmem:[%s170 + $0x10] sm:$0xff]
        %v211 = vld [vmem:[%s170 + $0x18] sm:$0xff]
        %213 = vset.pattern.permute.xlu0 0
        %214 = vperm.xlu0 %213, %v204
        %v215 = vpop.permute.xlu0 %214
        %218 = vset.pattern.permute.xlu0 0
        %219 = vperm.xlu0 %218, %v205
        %v220 = vpop.permute.xlu0 %219
        %223 = vset.pattern.permute.xlu0 0
        %224 = vperm.xlu0 %223, %v206
        %v225 = vpop.permute.xlu0 %224
        %228 = vset.pattern.permute.xlu0 0
        %229 = vperm.xlu0 %228, %v207
        %v230 = vpop.permute.xlu0 %229
        %v232 = vmul.f32 %v208, %v215
        %v233 = vmul.f32 %v209, %v220
        %v234 = vmul.f32 %v210, %v225
        %v235 = vmul.f32 %v211, %v230
        %236 = vst [vmem:[%s195] sm:$0xff] %v232
        %237 = vst [vmem:[%s195 + $0x8] sm:$0xff] %v233
        %238 = vst [vmem:[%s195 + $0x10] sm:$0xff] %v234
        %239 = vst [vmem:[%s195 + $0x18] sm:$0xff] %v235
        %s240 = sand.u32 %s95, 1
        %s241 = scalar_lea.sflag [#allocation4], %s240
        %s242 = sand.u32 %s95, 1
        %s243 = smul.addr %s242, 32
        %s244 = scalar_lea.vmem [#allocation5], %s243
        // Predicated region
        $region33: #{tpu_custom_call.1} parent=27 // pred_check
          %p245 = pneg %p105
        $region34: #{tpu_custom_call.1} parent=27 // pred_check_branch
          %247 = sbr.rel (%p245) target = $region36
        $region35: #{tpu_custom_call.1} parent=27 // pred_region
          %s248 = smul.u32 4, %s23
          %s250 = ssub.s32 512, 512
          %251 = vsyncadd %s241, %s250
          %s252 = smul.addr %s248, 2
          %s253 = sadd.s32 %s24, %s252
          %s254 = smul.addr %s253, 128
          %s255 = scalar_lea.hbm %s2, %s254
          %s256 = sshll.u32 %s244, 4
          %s257 = int_to_ptr.vmem [resolvable:$true] %s256
          %262 = dma.vmem_to_hbm [thread:$0]  %s257, 512, %s255, %s241, 128, 256, 8
        $region36: #{tpu_custom_call.1} parent=27 // pred_fallthru
          _
      $region28: #{tpu_custom_call.1} parent=5 // pred_fallthru
        _
      %p263 = scmp.le.s32.totalorder 2, %s14
      // Predicated region
      $region37: #{tpu_custom_call.1} parent=5 // pred_check
        %p264 = pneg %p263
      $region38: #{tpu_custom_call.1} parent=5 // pred_check_branch
        %266 = sbr.rel (%p264) target = $region40
      $region39: #{tpu_custom_call.1} parent=5 // pred_region
        %s267 = ssub.s32 %s14, 2
        // Predicated region
        $region41: #{tpu_custom_call.1} parent=39 // pred_check
          %p268 = pneg %p111
        $region42: #{tpu_custom_call.1} parent=39 // pred_check_branch
          %270 = sbr.rel (%p268) target = $region44
        $region43: #{tpu_custom_call.1} parent=39 // pred_region
          %s271 = sand.u32 %s96, 1
          %s272 = scalar_lea.sflag [#allocation4], %s271
          %s273 = sand.u32 %s96, 1
          %s274 = smul.addr %s273, 32
          %s275 = scalar_lea.vmem [#allocation5], %s274
          %276 = dma.done %s272, 512
        $region44: #{tpu_custom_call.1} parent=39 // pred_fallthru
          _
      $region40: #{tpu_custom_call.1} parent=5 // pred_fallthru
        _
    $region6: #{tpu_custom_call.1} parent=1 // loop_footer
      %s18 = sadd.s32 1, %s14
    $region7: #{tpu_custom_call.1} parent=1 // loop_footer_branch
      %13 = sbr.rel target = $region3
    $region8: #{tpu_custom_call.1} parent=1 // loop_exit
      _
    %277 = vsyncpa [#allocation3], 1
    %s278 = scalar_lea.sflag [#allocation3], 1
    %279 = vsyncpa %s278, 1
    %280 = vsyncpa [#allocation4], 1
    %s281 = scalar_lea.sflag [#allocation4], 1
    %282 = vsyncpa %s281, 1

</llo_original>
